<compile_context>
chip_gen: v5e
topology: v5e:2x2
jax: 0.10.0
libtpu: 0.0.40
codegen_flags: <defaults>
</compile_context>

<pallas_src>
import numpy as np

import jax
import jax.numpy as jnp
from jax.experimental import pallas as pl
from jax.experimental.pallas import tpu as pltpu


POSTNET_K = 5
VOC_K = 7
UP_K = 8
UP_STRIDE = 4
LEAKY_SLOPE = 0.2

# Set to jnp.bfloat16 for the native MXU fast path on v5e/v6e/v7x (halves weight VMEM
# footprint, keeps f32 accumulation); default f32 to match the f32 reference exactly.
MXU_DTYPE = jnp.float32


def _act(x, kind):
    if kind == "tanh":
        return jnp.tanh(x)
    if kind == "leaky_relu":
        return jnp.where(x >= 0, x, LEAKY_SLOPE * x)
    return x


def _mxu_dot(x, w):
    """Single MXU dot; operands in the (precomputed) weight dtype, f32 accumulation."""
    if x.dtype != w.dtype:
        x = x.astype(w.dtype)
    return jnp.dot(x, w, preferred_element_type=jnp.float32)


# ------------------------------ fused Pallas kernel -----------------------------------

def _fused_decoder_vocoder_kernel(
    x_ref,
    mel_w_ref, mel_b_ref,
    pn1_w_ref, pn1_b_ref, pn2_w_ref, pn2_b_ref, pn3_w_ref, pn3_b_ref,
    vin_w_ref, vin_b_ref,
    up1_w_ref, up1_b_ref, up2_w_ref, up2_b_ref, out_w_ref, out_b_ref,
    wav_ref,
):
    f32 = jnp.float32
    T = x_ref.shape[0]

    def conv_same(x, w_ref, b_ref, act):
        """Stride-1 'same' conv over rows, everything in registers.

        x: [T, Cin]; w_ref: [Cin, K*Cout] with tap k's weights in output-column block k
        (packed host-side); b_ref: [1, Cout].  One MXU push, then K static shifted-slice
        adds realise the tap offsets (zero halo rows via an in-register concat)."""
        Cout = b_ref.shape[1]
        KCout = w_ref.shape[1]
        K = KCout // Cout
        pad = (K - 1) // 2
        y = _mxu_dot(x, w_ref[...])                                   # [T, K*Cout]
        z = jnp.zeros((pad, KCout), f32)
        yp = jnp.concatenate([z, y, z], axis=0)                       # [T+2*pad, K*Cout]
        acc = yp[0:T, 0:Cout]                                         # tap k = 0
        for k in range(1, K):                                         # static, unrolled
            acc = acc + yp[k:k + T, k * Cout:(k + 1) * Cout]
        return _act(acc + b_ref[...], act)                            # bias added once

    # ---- MelSpectrogramDecoder: mel linear + 3-layer conv postnet + residual ----------
    x = x_ref[...]                                                    # [T, H]
    mel = _mxu_dot(x, mel_w_ref[...]) + mel_b_ref[...]                # [T, n_mels]
    h = conv_same(mel, pn1_w_ref, pn1_b_ref, "tanh")
    h = conv_same(h, pn2_w_ref, pn2_b_ref, "tanh")
    h = conv_same(h, pn3_w_ref, pn3_b_ref, "none")
    post = mel + h                                                    # [T, n_mels]

    # ---- MelGAN-style vocoder, fully phase-packed at the mel-frame rate ---------------
    v = conv_same(post, vin_w_ref, vin_b_ref, "leaky_relu")           # [T, 32]
    u1 = conv_same(v, up1_w_ref, up1_b_ref, "leaky_relu")             # [T, 4*16]  x4 up
    u2 = conv_same(u1, up2_w_ref, up2_b_ref, "leaky_relu")            # [T, 16*8]  x16 up
    wav_ref[...] = conv_same(u2, out_w_ref, out_b_ref, "tanh")        # [T, 16] wav rows


def decoder_forward(packed, length_regulated):
    """Pallas implementation of Decoder.forward (melgan path).

    length_regulated: [B, T, H] -> wavs [1, T * UP_STRIDE**2]."""
    # Only postnet_outputs[0] feeds the vocoder: skip the dead batch elements entirely.
    x0 = length_regulated[0]
    T = x0.shape[0]
    wav_per_row = UP_STRIDE * UP_STRIDE

    args = (
        x0,
        packed["mel_w"], packed["mel_b"],
        packed["pn1_w"], packed["pn1_b"],
        packed["pn2_w"], packed["pn2_b"],
        packed["pn3_w"], packed["pn3_b"],
        packed["vin_w"], packed["vin_b"],
        packed["up1_w"], packed["up1_b"],
        packed["up2_w"], packed["up2_b"],
        packed["out_w"], packed["out_b"],
    )
    wav_rows = pl.pallas_call(
        _fused_decoder_vocoder_kernel,
        out_shape=jax.ShapeDtypeStruct((T, wav_per_row), jnp.float32),
        in_specs=[pl.BlockSpec(memory_space=pltpu.MemorySpace.VMEM)] * len(args),
        out_specs=pl.BlockSpec(memory_space=pltpu.MemorySpace.VMEM),
    )(*args)
    # [T, 16] -> [16*T]: row-major reshape == phase interleave (free layout op in XLA).
    wav = wav_rows.reshape(-1)
    return wav[None, :]                                    # .unsqueeze(0)


# ------------------- one-time host-side weight preparation ----------------------------

def _convtranspose_as_phase_conv(w_t, b, stride, pad):
    """ConvTranspose1d (weight [Cin, Cout, K], PyTorch layout) expressed as a stride-1
    'same' conv at the INPUT row rate whose outputs are phase-packed along channels:
        out_packed[q, r*Cout + co] == convtranspose_out[q*stride + r, co]
    Returns (W [span, Cin, stride*Cout], b_packed [stride*Cout])."""
    w_t = np.asarray(w_t, np.float32)
    b = np.asarray(b, np.float32)
    Cin, Cout, K = w_t.shape
    pad_eff = K - 1 - pad
    taps = []
    for r in range(stride):
        for k in range(K):
            if (k - (pad_eff - r)) % stride == 0:
                taps.append((r, (k - (pad_eff - r)) // stride, k))
    d_min = min(d for _, d, _ in taps)
    d_max = max(d for _, d, _ in taps)
    assert d_max == -d_min, "phase conv is not symmetric for these convT params"
    w = np.zeros((d_max - d_min + 1, Cin, stride * Cout), np.float32)
    for r, d, k in taps:
        w[d - d_min, :, r * Cout:(r + 1) * Cout] = w_t[:, :, K - 1 - k]
    return w, np.tile(b, stride)


def _repack_conv(w, b, pack):
    """Re-express a stride-1 symmetric 'same' conv (weight [S, Cin, Cout]) running at a
    fine row rate as an equivalent conv at 1/pack of that rate, with input AND output
    rows phase-packed along channels (fine row m -> packed row m//pack, block m%pack)."""
    w = np.asarray(w, np.float32)
    b = np.asarray(b, np.float32)
    S, Cin, Cout = w.shape
    P = (S - 1) // 2
    entries = []
    for rout in range(pack):
        for j in range(S):
            dq, rin = divmod(rout + j - P, pack)
            entries.append((rout, j, dq, rin))
    dq_max = max(e[2] for e in entries)
    assert dq_max == -min(e[2] for e in entries)
    wc = np.zeros((2 * dq_max + 1, pack * Cin, pack * Cout), np.float32)
    for rout, j, dq, rin in entries:
        wc[dq + dq_max, rin * Cin:(rin + 1) * Cin, rout * Cout:(rout + 1) * Cout] += w[j]
    return wc, np.tile(b, pack)


def _pack_w_all(w):
    """[K, Cin, Cout] tap-major conv weight -> [Cin, K*Cout] with tap k's columns in
    output block k, so the whole layer is ONE dot; stored in the MXU operand dtype."""
    w = np.asarray(w, np.float32)
    K, Cin, Cout = w.shape
    return jnp.asarray(np.transpose(w, (1, 0, 2)).reshape(Cin, K * Cout), MXU_DTYPE)


def prepare_packed_params(raw):
    """Precompute polyphase / phase-packed / column-packed conv weights (done once)."""
    def b2(v):
        return jnp.asarray(np.asarray(v, np.float32).reshape(1, -1))

    up1_w, up1_b = _convtranspose_as_phase_conv(raw["v_up1_w"], raw["v_up1_b"], UP_STRIDE, 2)
    up2_f_w, up2_f_b = _convtranspose_as_phase_conv(raw["v_up2_w"], raw["v_up2_b"], UP_STRIDE, 2)
    up2_w, up2_b = _repack_conv(up2_f_w, up2_f_b, UP_STRIDE)                 # run at mel rate
    out_w, out_b = _repack_conv(np.asarray(raw["v_out_w"]),
                                np.asarray(raw["v_out_b"]),
                                UP_STRIDE * UP_STRIDE)                       # run at mel rate

    return {
        "mel_w": jnp.asarray(np.asarray(raw["mel_w"], np.float32), MXU_DTYPE),
        "mel_b": b2(raw["mel_b"]),
        "pn1_w": _pack_w_all(raw["pn1_w"]), "pn1_b": b2(raw["pn1_b"]),       # [16, 160]
        "pn2_w": _pack_w_all(raw["pn2_w"]), "pn2_b": b2(raw["pn2_b"]),       # [32, 160]
        "pn3_w": _pack_w_all(raw["pn3_w"]), "pn3_b": b2(raw["pn3_b"]),       # [32, 80]
        "vin_w": _pack_w_all(raw["v_in_w"]), "vin_b": b2(raw["v_in_b"]),     # [16, 224]
        "up1_w": _pack_w_all(up1_w), "up1_b": b2(up1_b),                     # [32, 192]
        "up2_w": _pack_w_all(up2_w), "up2_b": b2(up2_b),                     # [64, 384]
        "out_w": _pack_w_all(out_w), "out_b": b2(out_b),                     # [128, 48]
    }


# --------------------------------- parameters ------------------------------------------

def init_params(key, hidden, n_mels, pc):
    ks = jax.random.split(key, 16)
    s = 0.1
    return {
        # MelSpectrogramDecoder (mel linear + 3-layer conv postnet)
        "mel_w": s * jax.random.normal(ks[0], (hidden, n_mels), jnp.float32),
        "mel_b": s * jax.random.normal(ks[1], (n_mels,), jnp.float32),
        "pn1_w": s * jax.random.normal(ks[2], (POSTNET_K, n_mels, pc), jnp.float32),
        "pn1_b": s * jax.random.normal(ks[3], (pc,), jnp.float32),
        "pn2_w": s * jax.random.normal(ks[4], (POSTNET_K, pc, pc), jnp.float32),
        "pn2_b": s * jax.random.normal(ks[5], (pc,), jnp.float32),
        "pn3_w": s * jax.random.normal(ks[6], (POSTNET_K, pc, n_mels), jnp.float32),
        "pn3_b": s * jax.random.normal(ks[7], (n_mels,), jnp.float32),
        # MelGAN-style VocoderGenerator
        "v_in_w": s * jax.random.normal(ks[8], (VOC_K, n_mels, 32), jnp.float32),
        "v_in_b": s * jax.random.normal(ks[9], (32,), jnp.float32),
        "v_up1_w": s * jax.random.normal(ks[10], (32, 16, UP_K), jnp.float32),  # [Cin, Cout, K]
        "v_up1_b": s * jax.random.normal(ks[11], (16,), jnp.float32),
        "v_up2_w": s * jax.random.normal(ks[12], (16, 8, UP_K), jnp.float32),
        "v_up2_b": s * jax.random.normal(ks[13], (8,), jnp.float32),
        "v_out_w": s * jax.random.normal(ks[14], (VOC_K, 8, 1), jnp.float32),
        "v_out_b": s * jax.random.normal(ks[15], (1,), jnp.float32),
    }


# ------------------------------ pure-JAX reference -------------------------------------

def _ref_conv1d(x, w, b, pad, activation):
    K = w.shape[0]
    xp = jnp.pad(x, ((pad, pad), (0, 0)))
    L = xp.shape[0] - K + 1
    acc = jnp.zeros((L, w.shape[2]), jnp.float32) + b.reshape(1, -1)
    for k in range(K):
        acc = acc + xp[k:k + L] @ w[k]
    return _act(acc, activation)


def _ref_convt1d(x, w_t, b, stride, pad, activation):
    L, Cin = x.shape
    K = w_t.shape[2]
    up = jnp.zeros(((L - 1) * stride + 1, Cin), x.dtype).at[::stride].set(x)
    w_conv = jnp.transpose(w_t[:, :, ::-1], (2, 0, 1))
    return _ref_conv1d(up, w_conv, b, K - 1 - pad, activation)


def reference_forward(raw, length_regulated):
    x0 = length_regulated[0]
    mel = x0 @ raw["mel_w"] + raw["mel_b"]
    h = _ref_conv1d(mel, raw["pn1_w"], raw["pn1_b"], POSTNET_K // 2, "tanh")
    h = _ref_conv1d(h, raw["pn2_w"], raw["pn2_b"], POSTNET_K // 2, "tanh")
    h = _ref_conv1d(h, raw["pn3_w"], raw["pn3_b"], POSTNET_K // 2, "none")
    post = mel + h
    v = _ref_conv1d(post, raw["v_in_w"], raw["v_in_b"], VOC_K // 2, "leaky_relu")
    u1 = _ref_convt1d(v, raw["v_up1_w"], raw["v_up1_b"], UP_STRIDE, 2, "leaky_relu")
    u2 = _ref_convt1d(u1, raw["v_up2_w"], raw["v_up2_b"], UP_STRIDE, 2, "leaky_relu")
    wav = _ref_conv1d(u2, raw["v_out_w"], raw["v_out_b"], VOC_K // 2, "tanh")[:, 0]
    return wav[None, :]


# ------------------------------------- main ---------------------------------------------

if __name__ == "__main__":
    B, T, H = 2, 16, 32          # batch, mel frames, decoder hidden
    N_MELS, PC = 16, 32          # mel channels, postnet channels

    key = jax.random.PRNGKey(0)
    k_params, k_x = jax.random.split(key)
    raw = init_params(k_params, H, N_MELS, PC)
    packed = prepare_packed_params(raw)
    x = jax.random.normal(k_x, (B, T, H), jnp.float32)   # length_regulated_tensor

    wavs = jax.jit(decoder_forward)(packed, x)
    wavs = jax.block_until_ready(wavs)

    expected_len = T * UP_STRIDE * UP_STRIDE   # two x4 upsampling stages
    assert wavs.shape == (1, expected_len), wavs.shape
    assert bool(jnp.all(jnp.isfinite(wavs)))
    ref = reference_forward(raw, x)
    err = float(jnp.max(jnp.abs(wavs - ref)))
    assert err < 2e-3, err

    print("KERNEL_OK")
</pallas_src>

<mosaic_0001>
module attributes {stable_mosaic.version = 11 : i64} {
  func.func @_fused_decoder_vocoder_kernel(%arg0: memref<16x32xf32, #tpu.memory_space<vmem>>, %arg1: memref<32x16xf32, #tpu.memory_space<vmem>>, %arg2: memref<1x16xf32, #tpu.memory_space<vmem>>, %arg3: memref<16x160xf32, #tpu.memory_space<vmem>>, %arg4: memref<1x32xf32, #tpu.memory_space<vmem>>, %arg5: memref<32x160xf32, #tpu.memory_space<vmem>>, %arg6: memref<1x32xf32, #tpu.memory_space<vmem>>, %arg7: memref<32x80xf32, #tpu.memory_space<vmem>>, %arg8: memref<1x16xf32, #tpu.memory_space<vmem>>, %arg9: memref<16x224xf32, #tpu.memory_space<vmem>>, %arg10: memref<1x32xf32, #tpu.memory_space<vmem>>, %arg11: memref<32x192xf32, #tpu.memory_space<vmem>>, %arg12: memref<1x64xf32, #tpu.memory_space<vmem>>, %arg13: memref<64x384xf32, #tpu.memory_space<vmem>>, %arg14: memref<1x128xf32, #tpu.memory_space<vmem>>, %arg15: memref<128x48xf32, #tpu.memory_space<vmem>>, %arg16: memref<1x16xf32, #tpu.memory_space<vmem>>, %arg17: memref<16x16xf32, #tpu.memory_space<vmem>>) attributes {dimension_semantics = [], scalar_prefetch = 0 : i64, scratch_operands = 0 : i64, tpu.core_type = #tpu.core_type<tc>} {
    %c0 = arith.constant 0 : index
    %c0_0 = arith.constant 0 : index
    %0 = vector.load %arg0[%c0, %c0_0] : memref<16x32xf32, #tpu.memory_space<vmem>>, vector<16x32xf32>
    %c0_1 = arith.constant 0 : index
    %c0_2 = arith.constant 0 : index
    %1 = vector.load %arg1[%c0_1, %c0_2] : memref<32x16xf32, #tpu.memory_space<vmem>>, vector<32x16xf32>
    %cst = arith.constant dense<0.000000e+00> : vector<16x16xf32>
    %2 = tpu.matmul %0, %1, %cst {dimension_numbers = #tpu.dot_dimension_numbers<[1], [0], [0], [1], [0, 0, 1, 1], [], []>} : vector<16x32xf32>, vector<32x16xf32>, vector<16x16xf32> -> vector<16x16xf32>
    %c0_3 = arith.constant 0 : index
    %c0_4 = arith.constant 0 : index
    %3 = vector.load %arg2[%c0_3, %c0_4] : memref<1x16xf32, #tpu.memory_space<vmem>>, vector<1x16xf32>
    %4 = vector.broadcast %3 : vector<1x16xf32> to vector<16x16xf32>
    %5 = arith.addf %2, %4 : vector<16x16xf32>
    %c0_5 = arith.constant 0 : index
    %c0_6 = arith.constant 0 : index
    %6 = vector.load %arg3[%c0_5, %c0_6] : memref<16x160xf32, #tpu.memory_space<vmem>>, vector<16x160xf32>
    %cst_7 = arith.constant dense<0.000000e+00> : vector<16x160xf32>
    %7 = tpu.matmul %5, %6, %cst_7 {dimension_numbers = #tpu.dot_dimension_numbers<[1], [0], [0], [1], [0, 0, 1, 1], [], []>} : vector<16x16xf32>, vector<16x160xf32>, vector<16x160xf32> -> vector<16x160xf32>
    %cst_8 = arith.constant 0.000000e+00 : f32
    %8 = vector.broadcast %cst_8 : f32 to vector<2x160xf32>
    %9 = tpu.concatenate %8, %7, %8 in 0 : vector<2x160xf32>, vector<16x160xf32>, vector<2x160xf32> -> vector<20x160xf32>
    %10 = vector.extract_strided_slice %9 {offsets = [0, 0], sizes = [16, 32], strides = [1, 1]} : vector<20x160xf32> to vector<16x32xf32>
    %11 = vector.extract_strided_slice %9 {offsets = [1, 32], sizes = [16, 32], strides = [1, 1]} : vector<20x160xf32> to vector<16x32xf32>
    %12 = arith.addf %10, %11 : vector<16x32xf32>
    %13 = vector.extract_strided_slice %9 {offsets = [2, 64], sizes = [16, 32], strides = [1, 1]} : vector<20x160xf32> to vector<16x32xf32>
    %14 = arith.addf %12, %13 : vector<16x32xf32>
    %15 = vector.extract_strided_slice %9 {offsets = [3, 96], sizes = [16, 32], strides = [1, 1]} : vector<20x160xf32> to vector<16x32xf32>
    %16 = arith.addf %14, %15 : vector<16x32xf32>
    %17 = vector.extract_strided_slice %9 {offsets = [4, 128], sizes = [16, 32], strides = [1, 1]} : vector<20x160xf32> to vector<16x32xf32>
    %18 = arith.addf %16, %17 : vector<16x32xf32>
    %c0_9 = arith.constant 0 : index
    %c0_10 = arith.constant 0 : index
    %19 = vector.load %arg4[%c0_9, %c0_10] : memref<1x32xf32, #tpu.memory_space<vmem>>, vector<1x32xf32>
    %20 = vector.broadcast %19 : vector<1x32xf32> to vector<16x32xf32>
    %21 = arith.addf %18, %20 : vector<16x32xf32>
    %22 = math.tanh %21 : vector<16x32xf32>
    %c0_11 = arith.constant 0 : index
    %c0_12 = arith.constant 0 : index
    %23 = vector.load %arg5[%c0_11, %c0_12] : memref<32x160xf32, #tpu.memory_space<vmem>>, vector<32x160xf32>
    %cst_13 = arith.constant dense<0.000000e+00> : vector<16x160xf32>
    %24 = tpu.matmul %22, %23, %cst_13 {dimension_numbers = #tpu.dot_dimension_numbers<[1], [0], [0], [1], [0, 0, 1, 1], [], []>} : vector<16x32xf32>, vector<32x160xf32>, vector<16x160xf32> -> vector<16x160xf32>
    %cst_14 = arith.constant 0.000000e+00 : f32
    %25 = vector.broadcast %cst_14 : f32 to vector<2x160xf32>
    %26 = tpu.concatenate %25, %24, %25 in 0 : vector<2x160xf32>, vector<16x160xf32>, vector<2x160xf32> -> vector<20x160xf32>
    %27 = vector.extract_strided_slice %26 {offsets = [0, 0], sizes = [16, 32], strides = [1, 1]} : vector<20x160xf32> to vector<16x32xf32>
    %28 = vector.extract_strided_slice %26 {offsets = [1, 32], sizes = [16, 32], strides = [1, 1]} : vector<20x160xf32> to vector<16x32xf32>
    %29 = arith.addf %27, %28 : vector<16x32xf32>
    %30 = vector.extract_strided_slice %26 {offsets = [2, 64], sizes = [16, 32], strides = [1, 1]} : vector<20x160xf32> to vector<16x32xf32>
    %31 = arith.addf %29, %30 : vector<16x32xf32>
    %32 = vector.extract_strided_slice %26 {offsets = [3, 96], sizes = [16, 32], strides = [1, 1]} : vector<20x160xf32> to vector<16x32xf32>
    %33 = arith.addf %31, %32 : vector<16x32xf32>
    %34 = vector.extract_strided_slice %26 {offsets = [4, 128], sizes = [16, 32], strides = [1, 1]} : vector<20x160xf32> to vector<16x32xf32>
    %35 = arith.addf %33, %34 : vector<16x32xf32>
    %c0_15 = arith.constant 0 : index
    %c0_16 = arith.constant 0 : index
    %36 = vector.load %arg6[%c0_15, %c0_16] : memref<1x32xf32, #tpu.memory_space<vmem>>, vector<1x32xf32>
    %37 = vector.broadcast %36 : vector<1x32xf32> to vector<16x32xf32>
    %38 = arith.addf %35, %37 : vector<16x32xf32>
    %39 = math.tanh %38 : vector<16x32xf32>
    %c0_17 = arith.constant 0 : index
    %c0_18 = arith.constant 0 : index
    %40 = vector.load %arg7[%c0_17, %c0_18] : memref<32x80xf32, #tpu.memory_space<vmem>>, vector<32x80xf32>
    %cst_19 = arith.constant dense<0.000000e+00> : vector<16x80xf32>
    %41 = tpu.matmul %39, %40, %cst_19 {dimension_numbers = #tpu.dot_dimension_numbers<[1], [0], [0], [1], [0, 0, 1, 1], [], []>} : vector<16x32xf32>, vector<32x80xf32>, vector<16x80xf32> -> vector<16x80xf32>
    %cst_20 = arith.constant 0.000000e+00 : f32
    %42 = vector.broadcast %cst_20 : f32 to vector<2x80xf32>
    %43 = tpu.concatenate %42, %41, %42 in 0 : vector<2x80xf32>, vector<16x80xf32>, vector<2x80xf32> -> vector<20x80xf32>
    %44 = vector.extract_strided_slice %43 {offsets = [0, 0], sizes = [16, 16], strides = [1, 1]} : vector<20x80xf32> to vector<16x16xf32>
    %45 = vector.extract_strided_slice %43 {offsets = [1, 16], sizes = [16, 16], strides = [1, 1]} : vector<20x80xf32> to vector<16x16xf32>
    %46 = arith.addf %44, %45 : vector<16x16xf32>
    %47 = vector.extract_strided_slice %43 {offsets = [2, 32], sizes = [16, 16], strides = [1, 1]} : vector<20x80xf32> to vector<16x16xf32>
    %48 = arith.addf %46, %47 : vector<16x16xf32>
    %49 = vector.extract_strided_slice %43 {offsets = [3, 48], sizes = [16, 16], strides = [1, 1]} : vector<20x80xf32> to vector<16x16xf32>
    %50 = arith.addf %48, %49 : vector<16x16xf32>
    %51 = vector.extract_strided_slice %43 {offsets = [4, 64], sizes = [16, 16], strides = [1, 1]} : vector<20x80xf32> to vector<16x16xf32>
    %52 = arith.addf %50, %51 : vector<16x16xf32>
    %c0_21 = arith.constant 0 : index
    %c0_22 = arith.constant 0 : index
    %53 = vector.load %arg8[%c0_21, %c0_22] : memref<1x16xf32, #tpu.memory_space<vmem>>, vector<1x16xf32>
    %54 = vector.broadcast %53 : vector<1x16xf32> to vector<16x16xf32>
    %55 = arith.addf %52, %54 : vector<16x16xf32>
    %56 = arith.addf %5, %55 : vector<16x16xf32>
    %c0_23 = arith.constant 0 : index
    %c0_24 = arith.constant 0 : index
    %57 = vector.load %arg9[%c0_23, %c0_24] : memref<16x224xf32, #tpu.memory_space<vmem>>, vector<16x224xf32>
    %cst_25 = arith.constant dense<0.000000e+00> : vector<16x224xf32>
    %58 = tpu.matmul %56, %57, %cst_25 {dimension_numbers = #tpu.dot_dimension_numbers<[1], [0], [0], [1], [0, 0, 1, 1], [], []>} : vector<16x16xf32>, vector<16x224xf32>, vector<16x224xf32> -> vector<16x224xf32>
    %cst_26 = arith.constant 0.000000e+00 : f32
    %59 = vector.broadcast %cst_26 : f32 to vector<3x224xf32>
    %60 = tpu.concatenate %59, %58, %59 in 0 : vector<3x224xf32>, vector<16x224xf32>, vector<3x224xf32> -> vector<22x224xf32>
    %61 = vector.extract_strided_slice %60 {offsets = [0, 0], sizes = [16, 32], strides = [1, 1]} : vector<22x224xf32> to vector<16x32xf32>
    %62 = vector.extract_strided_slice %60 {offsets = [1, 32], sizes = [16, 32], strides = [1, 1]} : vector<22x224xf32> to vector<16x32xf32>
    %63 = arith.addf %61, %62 : vector<16x32xf32>
    %64 = vector.extract_strided_slice %60 {offsets = [2, 64], sizes = [16, 32], strides = [1, 1]} : vector<22x224xf32> to vector<16x32xf32>
    %65 = arith.addf %63, %64 : vector<16x32xf32>
    %66 = vector.extract_strided_slice %60 {offsets = [3, 96], sizes = [16, 32], strides = [1, 1]} : vector<22x224xf32> to vector<16x32xf32>
    %67 = arith.addf %65, %66 : vector<16x32xf32>
    %68 = vector.extract_strided_slice %60 {offsets = [4, 128], sizes = [16, 32], strides = [1, 1]} : vector<22x224xf32> to vector<16x32xf32>
    %69 = arith.addf %67, %68 : vector<16x32xf32>
    %70 = vector.extract_strided_slice %60 {offsets = [5, 160], sizes = [16, 32], strides = [1, 1]} : vector<22x224xf32> to vector<16x32xf32>
    %71 = arith.addf %69, %70 : vector<16x32xf32>
    %72 = vector.extract_strided_slice %60 {offsets = [6, 192], sizes = [16, 32], strides = [1, 1]} : vector<22x224xf32> to vector<16x32xf32>
    %73 = arith.addf %71, %72 : vector<16x32xf32>
    %c0_27 = arith.constant 0 : index
    %c0_28 = arith.constant 0 : index
    %74 = vector.load %arg10[%c0_27, %c0_28] : memref<1x32xf32, #tpu.memory_space<vmem>>, vector<1x32xf32>
    %75 = vector.broadcast %74 : vector<1x32xf32> to vector<16x32xf32>
    %76 = arith.addf %73, %75 : vector<16x32xf32>
    %cst_29 = arith.constant 0.000000e+00 : f32
    %77 = vector.broadcast %cst_29 : f32 to vector<16x32xf32>
    %78 = arith.cmpf oge, %76, %77 : vector<16x32xf32>
    %cst_30 = arith.constant 2.000000e-01 : f32
    %79 = vector.broadcast %cst_30 : f32 to vector<16x32xf32>
    %80 = arith.mulf %79, %76 : vector<16x32xf32>
    %81 = arith.select %78, %76, %80 : vector<16x32xi1>, vector<16x32xf32>
    %c0_31 = arith.constant 0 : index
    %c0_32 = arith.constant 0 : index
    %82 = vector.load %arg11[%c0_31, %c0_32] : memref<32x192xf32, #tpu.memory_space<vmem>>, vector<32x192xf32>
    %cst_33 = arith.constant dense<0.000000e+00> : vector<16x192xf32>
    %83 = tpu.matmul %81, %82, %cst_33 {dimension_numbers = #tpu.dot_dimension_numbers<[1], [0], [0], [1], [0, 0, 1, 1], [], []>} : vector<16x32xf32>, vector<32x192xf32>, vector<16x192xf32> -> vector<16x192xf32>
    %cst_34 = arith.constant 0.000000e+00 : f32
    %84 = vector.broadcast %cst_34 : f32 to vector<1x192xf32>
    %85 = tpu.concatenate %84, %83, %84 in 0 : vector<1x192xf32>, vector<16x192xf32>, vector<1x192xf32> -> vector<18x192xf32>
    %86 = vector.extract_strided_slice %85 {offsets = [0, 0], sizes = [16, 64], strides = [1, 1]} : vector<18x192xf32> to vector<16x64xf32>
    %87 = vector.extract_strided_slice %85 {offsets = [1, 64], sizes = [16, 64], strides = [1, 1]} : vector<18x192xf32> to vector<16x64xf32>
    %88 = arith.addf %86, %87 : vector<16x64xf32>
    %89 = vector.extract_strided_slice %85 {offsets = [2, 128], sizes = [16, 64], strides = [1, 1]} : vector<18x192xf32> to vector<16x64xf32>
    %90 = arith.addf %88, %89 : vector<16x64xf32>
    %c0_35 = arith.constant 0 : index
    %c0_36 = arith.constant 0 : index
    %91 = vector.load %arg12[%c0_35, %c0_36] : memref<1x64xf32, #tpu.memory_space<vmem>>, vector<1x64xf32>
    %92 = vector.broadcast %91 : vector<1x64xf32> to vector<16x64xf32>
    %93 = arith.addf %90, %92 : vector<16x64xf32>
    %cst_37 = arith.constant 0.000000e+00 : f32
    %94 = vector.broadcast %cst_37 : f32 to vector<16x64xf32>
    %95 = arith.cmpf oge, %93, %94 : vector<16x64xf32>
    %cst_38 = arith.constant 2.000000e-01 : f32
    %96 = vector.broadcast %cst_38 : f32 to vector<16x64xf32>
    %97 = arith.mulf %96, %93 : vector<16x64xf32>
    %98 = arith.select %95, %93, %97 : vector<16x64xi1>, vector<16x64xf32>
    %c0_39 = arith.constant 0 : index
    %c0_40 = arith.constant 0 : index
    %99 = vector.load %arg13[%c0_39, %c0_40] : memref<64x384xf32, #tpu.memory_space<vmem>>, vector<64x384xf32>
    %cst_41 = arith.constant dense<0.000000e+00> : vector<16x384xf32>
    %100 = tpu.matmul %98, %99, %cst_41 {dimension_numbers = #tpu.dot_dimension_numbers<[1], [0], [0], [1], [0, 0, 1, 1], [], []>} : vector<16x64xf32>, vector<64x384xf32>, vector<16x384xf32> -> vector<16x384xf32>
    %cst_42 = arith.constant 0.000000e+00 : f32
    %101 = vector.broadcast %cst_42 : f32 to vector<1x384xf32>
    %102 = tpu.concatenate %101, %100, %101 in 0 : vector<1x384xf32>, vector<16x384xf32>, vector<1x384xf32> -> vector<18x384xf32>
    %103 = vector.extract_strided_slice %102 {offsets = [0, 0], sizes = [16, 128], strides = [1, 1]} : vector<18x384xf32> to vector<16x128xf32>
    %104 = vector.extract_strided_slice %102 {offsets = [1, 128], sizes = [16, 128], strides = [1, 1]} : vector<18x384xf32> to vector<16x128xf32>
    %105 = arith.addf %103, %104 : vector<16x128xf32>
    %106 = vector.extract_strided_slice %102 {offsets = [2, 256], sizes = [16, 128], strides = [1, 1]} : vector<18x384xf32> to vector<16x128xf32>
    %107 = arith.addf %105, %106 : vector<16x128xf32>
    %c0_43 = arith.constant 0 : index
    %c0_44 = arith.constant 0 : index
    %108 = vector.load %arg14[%c0_43, %c0_44] : memref<1x128xf32, #tpu.memory_space<vmem>>, vector<1x128xf32>
    %109 = vector.broadcast %108 : vector<1x128xf32> to vector<16x128xf32>
    %110 = arith.addf %107, %109 : vector<16x128xf32>
    %cst_45 = arith.constant 0.000000e+00 : f32
    %111 = vector.broadcast %cst_45 : f32 to vector<16x128xf32>
    %112 = arith.cmpf oge, %110, %111 : vector<16x128xf32>
    %cst_46 = arith.constant 2.000000e-01 : f32
    %113 = vector.broadcast %cst_46 : f32 to vector<16x128xf32>
    %114 = arith.mulf %113, %110 : vector<16x128xf32>
    %115 = arith.select %112, %110, %114 : vector<16x128xi1>, vector<16x128xf32>
    %c0_47 = arith.constant 0 : index
    %c0_48 = arith.constant 0 : index
    %116 = vector.load %arg15[%c0_47, %c0_48] : memref<128x48xf32, #tpu.memory_space<vmem>>, vector<128x48xf32>
    %cst_49 = arith.constant dense<0.000000e+00> : vector<16x48xf32>
    %117 = tpu.matmul %115, %116, %cst_49 {dimension_numbers = #tpu.dot_dimension_numbers<[1], [0], [0], [1], [0, 0, 1, 1], [], []>} : vector<16x128xf32>, vector<128x48xf32>, vector<16x48xf32> -> vector<16x48xf32>
    %cst_50 = arith.constant 0.000000e+00 : f32
    %118 = vector.broadcast %cst_50 : f32 to vector<1x48xf32>
    %119 = tpu.concatenate %118, %117, %118 in 0 : vector<1x48xf32>, vector<16x48xf32>, vector<1x48xf32> -> vector<18x48xf32>
    %120 = vector.extract_strided_slice %119 {offsets = [0, 0], sizes = [16, 16], strides = [1, 1]} : vector<18x48xf32> to vector<16x16xf32>
    %121 = vector.extract_strided_slice %119 {offsets = [1, 16], sizes = [16, 16], strides = [1, 1]} : vector<18x48xf32> to vector<16x16xf32>
    %122 = arith.addf %120, %121 : vector<16x16xf32>
    %123 = vector.extract_strided_slice %119 {offsets = [2, 32], sizes = [16, 16], strides = [1, 1]} : vector<18x48xf32> to vector<16x16xf32>
    %124 = arith.addf %122, %123 : vector<16x16xf32>
    %c0_51 = arith.constant 0 : index
    %c0_52 = arith.constant 0 : index
    %125 = vector.load %arg16[%c0_51, %c0_52] : memref<1x16xf32, #tpu.memory_space<vmem>>, vector<1x16xf32>
    %126 = vector.broadcast %125 : vector<1x16xf32> to vector<16x16xf32>
    %127 = arith.addf %124, %126 : vector<16x16xf32>
    %128 = math.tanh %127 : vector<16x16xf32>
    %c0_53 = arith.constant 0 : index
    %c0_54 = arith.constant 0 : index
    %129 = vector.load %arg17[%c0_53, %c0_54] : memref<16x16xf32, #tpu.memory_space<vmem>>, vector<16x16xf32>
    tpu.vector_store %arg17[%c0_53, %c0_54], %128 {strides = array<i32>} : memref<16x16xf32, #tpu.memory_space<vmem>>, vector<16x16xf32>,
    return
  }
}

</mosaic_0001>

<llo_original>
// kernel: decoder_forward.1
$region0: #{decoder_forward.1}
  #allocation0 [shape = 'u32[]', space=smem, size = 0x4, offset = 0x4, fixed_abs, tag = 'smem constant byte address 0x4 - core index']
  #allocation1 [shape = 'u32[72,128]{1,0:T(1,128)}', space=vmem, size = 0x9000, scoped, tag = 'internal scratch']
  %s0 = inlined_call_operand.vmem [shape: f32[16,32], index: 0, kind: input, shape index: {}]
  %s1 = inlined_call_operand.vmem [shape: f32[32,16], index: 1, kind: input, shape index: {}]
  %s2 = inlined_call_operand.vmem [shape: f32[1,16], index: 2, kind: input, shape index: {}]
  %s3 = inlined_call_operand.hbm [shape: f32[16,160], index: 3, kind: input, shape index: {}]
  %s4 = inlined_call_operand.vmem [shape: f32[1,32], index: 4, kind: input, shape index: {}]
  %s5 = inlined_call_operand.hbm [shape: f32[32,160], index: 5, kind: input, shape index: {}]
  %s6 = inlined_call_operand.vmem [shape: f32[1,32], index: 6, kind: input, shape index: {}]
  %s7 = inlined_call_operand.hbm [shape: f32[32,80], index: 7, kind: input, shape index: {}]
  %s8 = inlined_call_operand.vmem [shape: f32[1,16], index: 8, kind: input, shape index: {}]
  %s9 = inlined_call_operand.hbm [shape: f32[16,224], index: 9, kind: input, shape index: {}]
  %s10 = inlined_call_operand.vmem [shape: f32[1,32], index: 10, kind: input, shape index: {}]
  %s11 = inlined_call_operand.hbm [shape: f32[32,192], index: 11, kind: input, shape index: {}]
  %s12 = inlined_call_operand.vmem [shape: f32[1,64], index: 12, kind: input, shape index: {}]
  %s13 = inlined_call_operand.vmem [shape: f32[64,384], index: 13, kind: input, shape index: {}]
  %s14 = inlined_call_operand.vmem [shape: f32[1,128], index: 14, kind: input, shape index: {}]
  %s15 = inlined_call_operand.vmem [shape: f32[128,48], index: 15, kind: input, shape index: {}]
  %s16 = inlined_call_operand.vmem [shape: f32[1,16], index: 16, kind: input, shape index: {}]
  %s17 = inlined_call_operand.vmem [shape: f32[16,16], index: 17, kind: output, shape index: {}]
  %s18 = sld [smem:[#allocation0]]
  $region98: #{decoder_forward.1} parent=0
    _
  %s20 = ssub.s32 1, %s18
  %s21 = scalar_select 0, %s20, %s18
  $region1: #{decoder_forward.1} parent=0
    #allocation2 [shape = 'u8[16384]{0}', space=vmem, size = 0x4000, scoped, tag = 'input window, operand 3, single buffered']
    #allocation3 [shape = 's32[1]{0}', space=sflag, size = 0x4, scoped, tag = 'scoped memory for decoder_forward.1']
    #allocation4 [shape = 'u8[32768]{0}', space=vmem, size = 0x8000, scoped, tag = 'input window, operand 5, single buffered']
    #allocation5 [shape = 's32[1]{0}', space=sflag, size = 0x4, scoped, tag = 'scoped memory for decoder_forward.1']
    #allocation6 [shape = 'u8[16384]{0}', space=vmem, size = 0x4000, scoped, tag = 'input window, operand 7, single buffered']
    #allocation7 [shape = 'u8[16384]{0}', space=vmem, size = 0x4000, scoped, tag = 'input window, operand 9, single buffered']
    #allocation8 [shape = 's32[1]{0}', space=sflag, size = 0x4, scoped, tag = 'scoped memory for decoder_forward.1']
    #allocation9 [shape = 'u8[32768]{0}', space=vmem, size = 0x8000, scoped, tag = 'input window, operand 11, single buffered']
    %22 = vsyncpa [#allocation3], 0
    %23 = vsyncpa [#allocation5], 0
    %24 = vsyncpa [#allocation8], 0
    // Predicated region
    $region2: #{decoder_forward.1} parent=1 // pred_check
      _
    $region3: #{decoder_forward.1} parent=1 // pred_check_branch
      %26 = sbr.rel (0) target = $region5
    $region4: #{decoder_forward.1} parent=1 // pred_region
      _
    $region5: #{decoder_forward.1} parent=1 // pred_fallthru
      _
    // Predicated region
    $region6: #{decoder_forward.1} parent=1 // pred_check
      _
    $region7: #{decoder_forward.1} parent=1 // pred_check_branch
      %28 = sbr.rel (0) target = $region9
    $region8: #{decoder_forward.1} parent=1 // pred_region
      _
    $region9: #{decoder_forward.1} parent=1 // pred_fallthru
      _
    // Predicated region
    $region10: #{decoder_forward.1} parent=1 // pred_check
      _
    $region11: #{decoder_forward.1} parent=1 // pred_check_branch
      %30 = sbr.rel (0) target = $region13
    $region12: #{decoder_forward.1} parent=1 // pred_region
      _
    $region13: #{decoder_forward.1} parent=1 // pred_fallthru
      _
    // Predicated region
    $region14: #{decoder_forward.1} parent=1 // pred_check
      _
    $region15: #{decoder_forward.1} parent=1 // pred_check_branch
      %32 = sbr.rel (0) target = $region17
    $region16: #{decoder_forward.1} parent=1 // pred_region
      %34 = vsyncadd [#allocation3], 0
      %s35 = sshll.u32 %s3, 4
      %s36 = int_to_ptr.hbm [resolvable:$true] %s35
      %s37 = sshll.u32 [#allocation2], 4
      %s38 = int_to_ptr.vmem [resolvable:$true] %s37
      %43 = dma.hbm_to_vmem [thread:$0]  %s36, 512, %s38, [#allocation3], 256, 256, 16
    $region17: #{decoder_forward.1} parent=1 // pred_fallthru
      _
    // Predicated region
    $region18: #{decoder_forward.1} parent=1 // pred_check
      _
    $region19: #{decoder_forward.1} parent=1 // pred_check_branch
      %45 = sbr.rel (0) target = $region21
    $region20: #{decoder_forward.1} parent=1 // pred_region
      _
    $region21: #{decoder_forward.1} parent=1 // pred_fallthru
      _
    // Predicated region
    $region22: #{decoder_forward.1} parent=1 // pred_check
      _
    $region23: #{decoder_forward.1} parent=1 // pred_check_branch
      %47 = sbr.rel (0) target = $region25
    $region24: #{decoder_forward.1} parent=1 // pred_region
      %49 = vsyncadd [#allocation5], 0
      %s50 = sshll.u32 %s5, 4
      %s51 = int_to_ptr.hbm [resolvable:$true] %s50
      %s52 = sshll.u32 [#allocation4], 4
      %s53 = int_to_ptr.vmem [resolvable:$true] %s52
      %58 = dma.hbm_to_vmem [thread:$0]  %s51, 1024, %s53, [#allocation5], 256, 256, 16
    $region25: #{decoder_forward.1} parent=1 // pred_fallthru
      _
    // Predicated region
    $region26: #{decoder_forward.1} parent=1 // pred_check
      _
    $region27: #{decoder_forward.1} parent=1 // pred_check_branch
      %60 = sbr.rel (0) target = $region29
    $region28: #{decoder_forward.1} parent=1 // pred_region
      _
    $region29: #{decoder_forward.1} parent=1 // pred_fallthru
      _
    // Predicated region
    $region30: #{decoder_forward.1} parent=1 // pred_check
      _
    $region31: #{decoder_forward.1} parent=1 // pred_check_branch
      %62 = sbr.rel (0) target = $region33
    $region32: #{decoder_forward.1} parent=1 // pred_region
      %64 = vsyncadd [#allocation5], 0
      %s65 = sshll.u32 %s7, 4
      %s66 = int_to_ptr.hbm [resolvable:$true] %s65
      %s67 = sshll.u32 [#allocation6], 4
      %s68 = int_to_ptr.vmem [resolvable:$true] %s67
      %73 = dma.hbm_to_vmem [thread:$0]  %s66, 512, %s68, [#allocation5], 128, 128, 8
    $region33: #{decoder_forward.1} parent=1 // pred_fallthru
      _
    // Predicated region
    $region34: #{decoder_forward.1} parent=1 // pred_check
      _
    $region35: #{decoder_forward.1} parent=1 // pred_check_branch
      %75 = sbr.rel (0) target = $region37
    $region36: #{decoder_forward.1} parent=1 // pred_region
      _
    $region37: #{decoder_forward.1} parent=1 // pred_fallthru
      _
    // Predicated region
    $region38: #{decoder_forward.1} parent=1 // pred_check
      _
    $region39: #{decoder_forward.1} parent=1 // pred_check_branch
      %77 = sbr.rel (0) target = $region41
    $region40: #{decoder_forward.1} parent=1 // pred_region
      %79 = vsyncadd [#allocation8], 0
      %s80 = sshll.u32 %s9, 4
      %s81 = int_to_ptr.hbm [resolvable:$true] %s80
      %s82 = sshll.u32 [#allocation7], 4
      %s83 = int_to_ptr.vmem [resolvable:$true] %s82
      %88 = dma.hbm_to_vmem [thread:$0]  %s81, 512, %s83, [#allocation8], 256, 256, 16
    $region41: #{decoder_forward.1} parent=1 // pred_fallthru
      _
    // Predicated region
    $region42: #{decoder_forward.1} parent=1 // pred_check
      _
    $region43: #{decoder_forward.1} parent=1 // pred_check_branch
      %90 = sbr.rel (0) target = $region45
    $region44: #{decoder_forward.1} parent=1 // pred_region
      _
    $region45: #{decoder_forward.1} parent=1 // pred_fallthru
      _
    // Predicated region
    $region46: #{decoder_forward.1} parent=1 // pred_check
      _
    $region47: #{decoder_forward.1} parent=1 // pred_check_branch
      %92 = sbr.rel (0) target = $region49
    $region48: #{decoder_forward.1} parent=1 // pred_region
      %94 = vsyncadd [#allocation8], 0
      %s95 = sshll.u32 %s11, 4
      %s96 = int_to_ptr.hbm [resolvable:$true] %s95
      %s97 = sshll.u32 [#allocation9], 4
      %s98 = int_to_ptr.vmem [resolvable:$true] %s97
      %103 = dma.hbm_to_vmem [thread:$0]  %s96, 1024, %s98, [#allocation8], 256, 256, 16
    $region49: #{decoder_forward.1} parent=1 // pred_fallthru
      _
    // Predicated region
    $region50: #{decoder_forward.1} parent=1 // pred_check
      _
    $region51: #{decoder_forward.1} parent=1 // pred_check_branch
      %105 = sbr.rel (0) target = $region53
    $region52: #{decoder_forward.1} parent=1 // pred_region
      _
    $region53: #{decoder_forward.1} parent=1 // pred_fallthru
      _
    // Predicated region
    $region54: #{decoder_forward.1} parent=1 // pred_check
      _
    $region55: #{decoder_forward.1} parent=1 // pred_check_branch
      %107 = sbr.rel (0) target = $region57
    $region56: #{decoder_forward.1} parent=1 // pred_region
      _
    $region57: #{decoder_forward.1} parent=1 // pred_fallthru
      _
    // Predicated region
    $region58: #{decoder_forward.1} parent=1 // pred_check
      _
    $region59: #{decoder_forward.1} parent=1 // pred_check_branch
      %109 = sbr.rel (0) target = $region61
    $region60: #{decoder_forward.1} parent=1 // pred_region
      _
    $region61: #{decoder_forward.1} parent=1 // pred_fallthru
      _
    // Predicated region
    $region62: #{decoder_forward.1} parent=1 // pred_check
      _
    $region63: #{decoder_forward.1} parent=1 // pred_check_branch
      %111 = sbr.rel (0) target = $region65
    $region64: #{decoder_forward.1} parent=1 // pred_region
      _
    $region65: #{decoder_forward.1} parent=1 // pred_fallthru
      _
    // Predicated region
    $region66: #{decoder_forward.1} parent=1 // pred_check
      _
    $region67: #{decoder_forward.1} parent=1 // pred_check_branch
      %113 = sbr.rel (0) target = $region69
    $region68: #{decoder_forward.1} parent=1 // pred_region
      _
    $region69: #{decoder_forward.1} parent=1 // pred_fallthru
      _
    // Predicated region
    $region70: #{decoder_forward.1} parent=1 // pred_check
      _
    $region71: #{decoder_forward.1} parent=1 // pred_check_branch
      %115 = sbr.rel (0) target = $region73
    $region72: #{decoder_forward.1} parent=1 // pred_region
      %117 = dma.done [#allocation3], 512
    $region73: #{decoder_forward.1} parent=1 // pred_fallthru
      _
    // Predicated region
    $region74: #{decoder_forward.1} parent=1 // pred_check
      _
    $region75: #{decoder_forward.1} parent=1 // pred_check_branch
      %119 = sbr.rel (0) target = $region77
    $region76: #{decoder_forward.1} parent=1 // pred_region
      %121 = dma.done [#allocation5], 1024
    $region77: #{decoder_forward.1} parent=1 // pred_fallthru
      _
    // Predicated region
    $region78: #{decoder_forward.1} parent=1 // pred_check
      _
    $region79: #{decoder_forward.1} parent=1 // pred_check_branch
      %123 = sbr.rel (0) target = $region81
    $region80: #{decoder_forward.1} parent=1 // pred_region
      %125 = dma.done [#allocation5], 512
    $region81: #{decoder_forward.1} parent=1 // pred_fallthru
      _
    // Predicated region
    $region82: #{decoder_forward.1} parent=1 // pred_check
      _
    $region83: #{decoder_forward.1} parent=1 // pred_check_branch
      %127 = sbr.rel (0) target = $region85
    $region84: #{decoder_forward.1} parent=1 // pred_region
      %129 = dma.done [#allocation8], 512
    $region85: #{decoder_forward.1} parent=1 // pred_fallthru
      _
    // Predicated region
    $region86: #{decoder_forward.1} parent=1 // pred_check
      _
    $region87: #{decoder_forward.1} parent=1 // pred_check_branch
      %131 = sbr.rel (0) target = $region89
    $region88: #{decoder_forward.1} parent=1 // pred_region
      %133 = dma.done [#allocation8], 1024
    $region89: #{decoder_forward.1} parent=1 // pred_fallthru
      _
    %v134 = vld [vmem:[%s0] sm:$0xff]
    %v135 = vld [vmem:[%s0 + $0x8] sm:$0xff]
    %v136 = vld [vmem:[%s1] sm:$0xff]
    %v137 = vld [vmem:[%s1 + $0x8] sm:$0xff]
    %v138 = vld [vmem:[%s1 + $0x10] sm:$0xff]
    %v139 = vld [vmem:[%s1 + $0x18] sm:$0xff]
    %v140 = vld [vmem:[%s2] sm:$0x1]
    %v142 = vperm.slane %v140, 0
    %vm144 = vcmask 261120
    %v146 = vsel %vm144, %v134, 0
    %v149 = vsel %vm144, %v135, 0
    %151 = vmatpush.msra.mxu0 0.0
    %152 = vmatpush.msra.mxu0 0.0
    %153 = vmatpush.msra.mxu0 0.0
    %154 = vmatpush.msra.mxu0 0.0
    %155 = vmatpush.msra.mxu0 0.0
    %156 = vmatpush.msra.mxu0 0.0
    %157 = vmatpush.msra.mxu0 0.0
    %158 = vmatpush.msra.mxu0 0.0
    %159 = vmatpush.msra.mxu0 0.0
    %160 = vmatpush.msra.mxu0 0.0
    %161 = vmatpush.msra.mxu0 0.0
    %162 = vmatpush.msra.mxu0 0.0
    %163 = vmatpush.msra.mxu0 %v139
    %164 = vmatpush.msra.mxu0 %v138
    %165 = vmatpush.msra.mxu0 %v137
    %166 = vmatpush.msra.mxu0 %v136
    %167 = vmatmul.f32.gmra.mxu0 %v146
    %v168 = vpop.f32.mrf.mxu0
    %v169 = vadd.f32 %v142, %v168
    %170 = vmatmul.f32.gmra.mxu0 %v149
    %v171 = vpop.f32.mrf.mxu0
    %v172 = vadd.f32 %v142, %v171
    %173 = vdwg.mxu0
    %v174 = vld [vmem:[#allocation2] sm:$0xff]
    %v175 = vld [vmem:[#allocation2 + $0x8] sm:$0xff]
    %v176 = vld [vmem:[#allocation2 + $0x10] sm:$0xff]
    %v177 = vld [vmem:[#allocation2 + $0x18] sm:$0xff]
    %vm178 = vcmask 130048
    %v180 = vsel %vm178, %v169, 0
    %v183 = vsel %vm178, %v172, 0
    %185 = vmatpush.msra.mxu0 0.0
    %186 = vmatpush.msra.mxu0 0.0
    %187 = vmatpush.msra.mxu0 0.0
    %188 = vmatpush.msra.mxu0 0.0
    %189 = vmatpush.msra.mxu0 0.0
    %190 = vmatpush.msra.mxu0 0.0
    %191 = vmatpush.msra.mxu0 0.0
    %192 = vmatpush.msra.mxu0 0.0
    %193 = vmatpush.msra.mxu0 0.0
    %194 = vmatpush.msra.mxu0 0.0
    %195 = vmatpush.msra.mxu0 0.0
    %196 = vmatpush.msra.mxu0 0.0
    %197 = vmatpush.msra.mxu0 0.0
    %198 = vmatpush.msra.mxu0 0.0
    %199 = vmatpush.msra.mxu0 %v176
    %200 = vmatpush.msra.mxu0 %v174
    %201 = vmatmul.f32.gmra.mxu0 %v180
    %v202 = vpop.f32.mrf.mxu0
    %v203 = vadd.f32 0.0, %v202
    %204 = vmatmul.f32.gmra.mxu0 %v183
    %v205 = vpop.f32.mrf.mxu0
    %v206 = vadd.f32 0.0, %v205
    %207 = vdwg.mxu0
    %208 = vmatpush.msra.mxu0 0.0
    %209 = vmatpush.msra.mxu0 0.0
    %210 = vmatpush.msra.mxu0 0.0
    %211 = vmatpush.msra.mxu0 0.0
    %212 = vmatpush.msra.mxu0 0.0
    %213 = vmatpush.msra.mxu0 0.0
    %214 = vmatpush.msra.mxu0 0.0
    %215 = vmatpush.msra.mxu0 0.0
    %216 = vmatpush.msra.mxu0 0.0
    %217 = vmatpush.msra.mxu0 0.0
    %218 = vmatpush.msra.mxu0 0.0
    %219 = vmatpush.msra.mxu0 0.0
    %220 = vmatpush.msra.mxu0 0.0
    %221 = vmatpush.msra.mxu0 0.0
    %222 = vmatpush.msra.mxu0 %v177
    %223 = vmatpush.msra.mxu0 %v175
    %224 = vmatmul.f32.gmra.mxu0 %v180
    %v225 = vpop.f32.mrf.mxu0
    %v226 = vadd.f32 0.0, %v225
    %227 = vmatmul.f32.gmra.mxu0 %v183
    %v228 = vpop.f32.mrf.mxu0
    %v229 = vadd.f32 0.0, %v228
    %230 = vdwg.mxu0
    %vm235 = vcmask 1041408
    %v236 = vrot.slane %v203, 6
    %v237 = vrot.slane %v226, 6
    %v238 = vrot.slane %v206, 6
    %v239 = vsel %vm235, %v236, %v238
    %v240 = vrot.slane %v229, 6
    %v241 = vsel %vm235, %v237, %v240
    %v247 = vsel %vm235, 0.0, %v236
    %v248 = vsel %vm235, 0.0, %v237
    %v249 = vsel %vm235, %v238, 0.0
    %v250 = vsel %vm235, %v240, 0.0
    %vm253 = vcmask 1046528
    %v254 = vrot.slane %v247, 1
    %v255 = vrot.slane %v239, 1
    %v256 = vsel %vm253, %v254, %v255
    %v257 = vrot.slane %v249, 1
    %v258 = vsel %vm253, %v255, %v257
    %259 = vrot.lane.b32.xlu0 %v256, 96
    %v260 = vpop.permute.xlu0 %259
    %261 = vrot.lane.b32.xlu0 %v258, 96
    %v262 = vpop.permute.xlu0 %261
    %v265 = vadd.f32 %v247, %v260
    %v266 = vadd.f32 %v239, %v262
    %vm267 = vcmask 1045504
    %v268 = vrot.slane %v247, 2
    %v269 = vrot.slane %v239, 2
    %v270 = vsel %vm267, %v268, %v269
    %v271 = vrot.slane %v249, 2
    %v272 = vsel %vm267, %v269, %v271
    %273 = vrot.lane.b32.xlu0 %v270, 64
    %v274 = vpop.permute.xlu0 %273
    %275 = vrot.lane.b32.xlu0 %v272, 64
    %v276 = vpop.permute.xlu0 %275
    %v279 = vadd.f32 %v265, %v274
    %v280 = vadd.f32 %v266, %v276
    %vm281 = vcmask 1044480
    %v282 = vrot.slane %v247, 3
    %v283 = vrot.slane %v239, 3
    %v284 = vsel %vm281, %v282, %v283
    %v285 = vrot.slane %v249, 3
    %v286 = vsel %vm281, %v283, %v285
    %287 = vrot.lane.b32.xlu0 %v284, 32
    %v288 = vpop.permute.xlu0 %287
    %289 = vrot.lane.b32.xlu0 %v286, 32
    %v290 = vpop.permute.xlu0 %289
    %v293 = vadd.f32 %v279, %v288
    %v294 = vadd.f32 %v280, %v290
    %vm297 = vcmask 1043456
    %v298 = vrot.slane %v248, 4
    %v299 = vrot.slane %v241, 4
    %v300 = vsel %vm297, %v298, %v299
    %v301 = vrot.slane %v250, 4
    %v302 = vsel %vm297, %v299, %v301
    %v305 = vadd.f32 %v293, %v300
    %v306 = vadd.f32 %v294, %v302
    %v307 = vld [vmem:[%s4] sm:$0x1]
    %v309 = vperm.slane %v307, 0
    %v311 = vadd.f32 %v305, %v309
    %v312 = vadd.f32 %v306, %v309
    %v313 = vtanh.pop %v311
    %v314 = vtanh.pop %v312
    %v315 = vld [vmem:[#allocation4] sm:$0xff]
    %v316 = vld [vmem:[#allocation4 + $0x8] sm:$0xff]
    %v317 = vld [vmem:[#allocation4 + $0x10] sm:$0xff]
    %v318 = vld [vmem:[#allocation4 + $0x18] sm:$0xff]
    %v319 = vld [vmem:[#allocation4 + $0x20] sm:$0xff]
    %v320 = vld [vmem:[#allocation4 + $0x28] sm:$0xff]
    %v321 = vld [vmem:[#allocation4 + $0x30] sm:$0xff]
    %v322 = vld [vmem:[#allocation4 + $0x38] sm:$0xff]
    %v324 = vsel %vm144, %v313, 0
    %v327 = vsel %vm144, %v314, 0
    %329 = vmatpush.msra.mxu0 0.0
    %330 = vmatpush.msra.mxu0 0.0
    %331 = vmatpush.msra.mxu0 0.0
    %332 = vmatpush.msra.mxu0 0.0
    %333 = vmatpush.msra.mxu0 0.0
    %334 = vmatpush.msra.mxu0 0.0
    %335 = vmatpush.msra.mxu0 0.0
    %336 = vmatpush.msra.mxu0 0.0
    %337 = vmatpush.msra.mxu0 0.0
    %338 = vmatpush.msra.mxu0 0.0
    %339 = vmatpush.msra.mxu0 0.0
    %340 = vmatpush.msra.mxu0 0.0
    %341 = vmatpush.msra.mxu0 %v321
    %342 = vmatpush.msra.mxu0 %v319
    %343 = vmatpush.msra.mxu0 %v317
    %344 = vmatpush.msra.mxu0 %v315
    %345 = vmatmul.f32.gmra.mxu0 %v324
    %v346 = vpop.f32.mrf.mxu0
    %v347 = vadd.f32 0.0, %v346
    %348 = vmatmul.f32.gmra.mxu0 %v327
    %v349 = vpop.f32.mrf.mxu0
    %v350 = vadd.f32 0.0, %v349
    %351 = vdwg.mxu0
    %352 = vmatpush.msra.mxu0 0.0
    %353 = vmatpush.msra.mxu0 0.0
    %354 = vmatpush.msra.mxu0 0.0
    %355 = vmatpush.msra.mxu0 0.0
    %356 = vmatpush.msra.mxu0 0.0
    %357 = vmatpush.msra.mxu0 0.0
    %358 = vmatpush.msra.mxu0 0.0
    %359 = vmatpush.msra.mxu0 0.0
    %360 = vmatpush.msra.mxu0 0.0
    %361 = vmatpush.msra.mxu0 0.0
    %362 = vmatpush.msra.mxu0 0.0
    %363 = vmatpush.msra.mxu0 0.0
    %364 = vmatpush.msra.mxu0 %v322
    %365 = vmatpush.msra.mxu0 %v320
    %366 = vmatpush.msra.mxu0 %v318
    %367 = vmatpush.msra.mxu0 %v316
    %368 = vmatmul.f32.gmra.mxu0 %v324
    %v369 = vpop.f32.mrf.mxu0
    %v370 = vadd.f32 0.0, %v369
    %371 = vmatmul.f32.gmra.mxu0 %v327
    %v372 = vpop.f32.mrf.mxu0
    %v373 = vadd.f32 0.0, %v372
    %374 = vdwg.mxu0
    %v379 = vrot.slane %v347, 6
    %v380 = vrot.slane %v370, 6
    %v381 = vrot.slane %v350, 6
    %v382 = vsel %vm235, %v379, %v381
    %v383 = vrot.slane %v373, 6
    %v384 = vsel %vm235, %v380, %v383
    %v390 = vsel %vm235, 0.0, %v379
    %v391 = vsel %vm235, 0.0, %v380
    %v392 = vsel %vm235, %v381, 0.0
    %v393 = vsel %vm235, %v383, 0.0
    %v396 = vrot.slane %v390, 1
    %v397 = vrot.slane %v382, 1
    %v398 = vsel %vm253, %v396, %v397
    %v399 = vrot.slane %v392, 1
    %v400 = vsel %vm253, %v397, %v399
    %401 = vrot.lane.b32.xlu0 %v398, 96
    %v402 = vpop.permute.xlu0 %401
    %403 = vrot.lane.b32.xlu0 %v400, 96
    %v404 = vpop.permute.xlu0 %403
    %v407 = vadd.f32 %v390, %v402
    %v408 = vadd.f32 %v382, %v404
    %v409 = vrot.slane %v390, 2
    %v410 = vrot.slane %v382, 2
    %v411 = vsel %vm267, %v409, %v410
    %v412 = vrot.slane %v392, 2
    %v413 = vsel %vm267, %v410, %v412
    %414 = vrot.lane.b32.xlu0 %v411, 64
    %v415 = vpop.permute.xlu0 %414
    %416 = vrot.lane.b32.xlu0 %v413, 64
    %v417 = vpop.permute.xlu0 %416
    %v420 = vadd.f32 %v407, %v415
    %v421 = vadd.f32 %v408, %v417
    %v422 = vrot.slane %v390, 3
    %v423 = vrot.slane %v382, 3
    %v424 = vsel %vm281, %v422, %v423
    %v425 = vrot.slane %v392, 3
    %v426 = vsel %vm281, %v423, %v425
    %427 = vrot.lane.b32.xlu0 %v424, 32
    %v428 = vpop.permute.xlu0 %427
    %429 = vrot.lane.b32.xlu0 %v426, 32
    %v430 = vpop.permute.xlu0 %429
    %v433 = vadd.f32 %v420, %v428
    %v434 = vadd.f32 %v421, %v430
    %v437 = vrot.slane %v391, 4
    %v438 = vrot.slane %v384, 4
    %v439 = vsel %vm297, %v437, %v438
    %v440 = vrot.slane %v393, 4
    %v441 = vsel %vm297, %v438, %v440
    %v444 = vadd.f32 %v433, %v439
    %v445 = vadd.f32 %v434, %v441
    %v446 = vld [vmem:[%s6] sm:$0x1]
    %v448 = vperm.slane %v446, 0
    %v450 = vadd.f32 %v444, %v448
    %v451 = vadd.f32 %v445, %v448
    %v452 = vtanh.pop %v450
    %v453 = vtanh.pop %v451
    %v454 = vld [vmem:[#allocation6] sm:$0xff]
    %v455 = vld [vmem:[#allocation6 + $0x8] sm:$0xff]
    %v456 = vld [vmem:[#allocation6 + $0x10] sm:$0xff]
    %v457 = vld [vmem:[#allocation6 + $0x18] sm:$0xff]
    %v459 = vsel %vm144, %v452, 0
    %v462 = vsel %vm144, %v453, 0
    %464 = vmatpush.msra.mxu0 0.0
    %465 = vmatpush.msra.mxu0 0.0
    %466 = vmatpush.msra.mxu0 0.0
    %467 = vmatpush.msra.mxu0 0.0
    %468 = vmatpush.msra.mxu0 0.0
    %469 = vmatpush.msra.mxu0 0.0
    %470 = vmatpush.msra.mxu0 0.0
    %471 = vmatpush.msra.mxu0 0.0
    %472 = vmatpush.msra.mxu0 0.0
    %473 = vmatpush.msra.mxu0 0.0
    %474 = vmatpush.msra.mxu0 0.0
    %475 = vmatpush.msra.mxu0 0.0
    %476 = vmatpush.msra.mxu0 %v457
    %477 = vmatpush.msra.mxu0 %v456
    %478 = vmatpush.msra.mxu0 %v455
    %479 = vmatpush.msra.mxu0 %v454
    %480 = vmatmul.f32.gmra.mxu0 %v459
    %v481 = vpop.f32.mrf.mxu0
    %v482 = vadd.f32 0.0, %v481
    %483 = vmatmul.f32.gmra.mxu0 %v462
    %v484 = vpop.f32.mrf.mxu0
    %v485 = vadd.f32 0.0, %v484
    %486 = vdwg.mxu0
    %v489 = vrot.slane %v482, 6
    %v490 = vrot.slane %v485, 6
    %v491 = vsel %vm235, %v489, %v490
    %v495 = vsel %vm235, 0.0, %v489
    %v496 = vsel %vm235, %v490, 0.0
    %v499 = vrot.slane %v495, 1
    %v500 = vrot.slane %v491, 1
    %v501 = vsel %vm253, %v499, %v500
    %v502 = vrot.slane %v496, 1
    %v503 = vsel %vm253, %v500, %v502
    %504 = vrot.lane.b32.xlu0 %v501, 112
    %v505 = vpop.permute.xlu0 %504
    %506 = vrot.lane.b32.xlu0 %v503, 112
    %v507 = vpop.permute.xlu0 %506
    %v510 = vadd.f32 %v495, %v505
    %v511 = vadd.f32 %v491, %v507
    %v512 = vrot.slane %v495, 2
    %v513 = vrot.slane %v491, 2
    %v514 = vsel %vm267, %v512, %v513
    %v515 = vrot.slane %v496, 2
    %v516 = vsel %vm267, %v513, %v515
    %517 = vrot.lane.b32.xlu0 %v514, 96
    %v518 = vpop.permute.xlu0 %517
    %519 = vrot.lane.b32.xlu0 %v516, 96
    %v520 = vpop.permute.xlu0 %519
    %v523 = vadd.f32 %v510, %v518
    %v524 = vadd.f32 %v511, %v520
    %v525 = vrot.slane %v495, 3
    %v526 = vrot.slane %v491, 3
    %v527 = vsel %vm281, %v525, %v526
    %v528 = vrot.slane %v496, 3
    %v529 = vsel %vm281, %v526, %v528
    %530 = vrot.lane.b32.xlu0 %v527, 80
    %v531 = vpop.permute.xlu0 %530
    %532 = vrot.lane.b32.xlu0 %v529, 80
    %v533 = vpop.permute.xlu0 %532
    %v536 = vadd.f32 %v523, %v531
    %v537 = vadd.f32 %v524, %v533
    %v538 = vrot.slane %v495, 4
    %v539 = vrot.slane %v491, 4
    %v540 = vsel %vm297, %v538, %v539
    %v541 = vrot.slane %v496, 4
    %v542 = vsel %vm297, %v539, %v541
    %543 = vrot.lane.b32.xlu0 %v540, 64
    %v544 = vpop.permute.xlu0 %543
    %545 = vrot.lane.b32.xlu0 %v542, 64
    %v546 = vpop.permute.xlu0 %545
    %v549 = vadd.f32 %v536, %v544
    %v550 = vadd.f32 %v537, %v546
    %v551 = vld [vmem:[%s8] sm:$0x1]
    %v553 = vperm.slane %v551, 0
    %v555 = vadd.f32 %v549, %v553
    %v556 = vadd.f32 %v550, %v553
    %v557 = vadd.f32 %v169, %v555
    %v558 = vadd.f32 %v172, %v556
    %v559 = vld [vmem:[#allocation7] sm:$0xff]
    %v560 = vld [vmem:[#allocation7 + $0x8] sm:$0xff]
    %v561 = vld [vmem:[#allocation7 + $0x10] sm:$0xff]
    %v562 = vld [vmem:[#allocation7 + $0x18] sm:$0xff]
    %v564 = vsel %vm178, %v557, 0
    %v567 = vsel %vm178, %v558, 0
    %569 = vmatpush.msra.mxu0 0.0
    %570 = vmatpush.msra.mxu0 0.0
    %571 = vmatpush.msra.mxu0 0.0
    %572 = vmatpush.msra.mxu0 0.0
    %573 = vmatpush.msra.mxu0 0.0
    %574 = vmatpush.msra.mxu0 0.0
    %575 = vmatpush.msra.mxu0 0.0
    %576 = vmatpush.msra.mxu0 0.0
    %577 = vmatpush.msra.mxu0 0.0
    %578 = vmatpush.msra.mxu0 0.0
    %579 = vmatpush.msra.mxu0 0.0
    %580 = vmatpush.msra.mxu0 0.0
    %581 = vmatpush.msra.mxu0 0.0
    %582 = vmatpush.msra.mxu0 0.0
    %583 = vmatpush.msra.mxu0 %v561
    %584 = vmatpush.msra.mxu0 %v559
    %585 = vmatmul.f32.gmra.mxu0 %v564
    %v586 = vpop.f32.mrf.mxu0
    %v587 = vadd.f32 0.0, %v586
    %588 = vmatmul.f32.gmra.mxu0 %v567
    %v589 = vpop.f32.mrf.mxu0
    %v590 = vadd.f32 0.0, %v589
    %591 = vdwg.mxu0
    %592 = vmatpush.msra.mxu0 0.0
    %593 = vmatpush.msra.mxu0 0.0
    %594 = vmatpush.msra.mxu0 0.0
    %595 = vmatpush.msra.mxu0 0.0
    %596 = vmatpush.msra.mxu0 0.0
    %597 = vmatpush.msra.mxu0 0.0
    %598 = vmatpush.msra.mxu0 0.0
    %599 = vmatpush.msra.mxu0 0.0
    %600 = vmatpush.msra.mxu0 0.0
    %601 = vmatpush.msra.mxu0 0.0
    %602 = vmatpush.msra.mxu0 0.0
    %603 = vmatpush.msra.mxu0 0.0
    %604 = vmatpush.msra.mxu0 0.0
    %605 = vmatpush.msra.mxu0 0.0
    %606 = vmatpush.msra.mxu0 %v562
    %607 = vmatpush.msra.mxu0 %v560
    %608 = vmatmul.f32.gmra.mxu0 %v564
    %v609 = vpop.f32.mrf.mxu0
    %v610 = vadd.f32 0.0, %v609
    %611 = vmatmul.f32.gmra.mxu0 %v567
    %v612 = vpop.f32.mrf.mxu0
    %v613 = vadd.f32 0.0, %v612
    %614 = vdwg.mxu0
    %vm619 = vcmask 1042432
    %v620 = vrot.slane %v587, 5
    %v621 = vrot.slane %v610, 5
    %v622 = vrot.slane %v590, 5
    %v623 = vsel %vm619, %v620, %v622
    %v624 = vrot.slane %v613, 5
    %v625 = vsel %vm619, %v621, %v624
    %v631 = vsel %vm619, 0.0, %v620
    %v632 = vsel %vm619, 0.0, %v621
    %v633 = vsel %vm619, %v622, 0.0
    %v634 = vsel %vm619, %v624, 0.0
    %v637 = vrot.slane %v631, 1
    %v638 = vrot.slane %v623, 1
    %v639 = vsel %vm253, %v637, %v638
    %v640 = vrot.slane %v633, 1
    %v641 = vsel %vm253, %v638, %v640
    %642 = vrot.lane.b32.xlu0 %v639, 96
    %v643 = vpop.permute.xlu0 %642
    %644 = vrot.lane.b32.xlu0 %v641, 96
    %v645 = vpop.permute.xlu0 %644
    %v648 = vadd.f32 %v631, %v643
    %v649 = vadd.f32 %v623, %v645
    %v650 = vrot.slane %v631, 2
    %v651 = vrot.slane %v623, 2
    %v652 = vsel %vm267, %v650, %v651
    %v653 = vrot.slane %v633, 2
    %v654 = vsel %vm267, %v651, %v653
    %655 = vrot.lane.b32.xlu0 %v652, 64
    %v656 = vpop.permute.xlu0 %655
    %657 = vrot.lane.b32.xlu0 %v654, 64
    %v658 = vpop.permute.xlu0 %657
    %v661 = vadd.f32 %v648, %v656
    %v662 = vadd.f32 %v649, %v658
    %v663 = vrot.slane %v631, 3
    %v664 = vrot.slane %v623, 3
    %v665 = vsel %vm281, %v663, %v664
    %v666 = vrot.slane %v633, 3
    %v667 = vsel %vm281, %v664, %v666
    %668 = vrot.lane.b32.xlu0 %v665, 32
    %v669 = vpop.permute.xlu0 %668
    %670 = vrot.lane.b32.xlu0 %v667, 32
    %v671 = vpop.permute.xlu0 %670
    %v674 = vadd.f32 %v661, %v669
    %v675 = vadd.f32 %v662, %v671
    %v678 = vrot.slane %v632, 4
    %v679 = vrot.slane %v625, 4
    %v680 = vsel %vm297, %v678, %v679
    %v681 = vrot.slane %v634, 4
    %v682 = vsel %vm297, %v679, %v681
    %v685 = vadd.f32 %v674, %v680
    %v686 = vadd.f32 %v675, %v682
    %v687 = vrot.slane %v632, 5
    %v688 = vrot.slane %v625, 5
    %v689 = vsel %vm619, %v687, %v688
    %v690 = vrot.slane %v634, 5
    %v691 = vsel %vm619, %v688, %v690
    %692 = vrot.lane.b32.xlu0 %v689, 96
    %v693 = vpop.permute.xlu0 %692
    %694 = vrot.lane.b32.xlu0 %v691, 96
    %v695 = vpop.permute.xlu0 %694
    %v698 = vadd.f32 %v685, %v693
    %v699 = vadd.f32 %v686, %v695
    %v700 = vrot.slane %v632, 6
    %v701 = vrot.slane %v625, 6
    %v702 = vsel %vm235, %v700, %v701
    %v703 = vrot.slane %v634, 6
    %v704 = vsel %vm235, %v701, %v703
    %705 = vrot.lane.b32.xlu0 %v702, 64
    %v706 = vpop.permute.xlu0 %705
    %707 = vrot.lane.b32.xlu0 %v704, 64
    %v708 = vpop.permute.xlu0 %707
    %v711 = vadd.f32 %v698, %v706
    %v712 = vadd.f32 %v699, %v708
    %v713 = vld [vmem:[%s10] sm:$0x1]
    %v715 = vperm.slane %v713, 0
    %v717 = vadd.f32 %v711, %v715
    %v718 = vadd.f32 %v712, %v715
    %vm719 = vcmp.ge.f32.partialorder %v717, 0.0
    %vm720 = vcmp.ge.f32.partialorder %v718, 0.0
    %v721 = vmul.f32 %v717, 0.2
    %v722 = vmul.f32 %v718, 0.2
    %v723 = vsel %vm719, %v717, %v721
    %v724 = vsel %vm720, %v718, %v722
    %v725 = vld [vmem:[#allocation9] sm:$0xff]
    %v726 = vld [vmem:[#allocation9 + $0x8] sm:$0xff]
    %v727 = vld [vmem:[#allocation9 + $0x10] sm:$0xff]
    %v728 = vld [vmem:[#allocation9 + $0x18] sm:$0xff]
    %v729 = vld [vmem:[#allocation9 + $0x20] sm:$0xff]
    %v730 = vld [vmem:[#allocation9 + $0x28] sm:$0xff]
    %v731 = vld [vmem:[#allocation9 + $0x30] sm:$0xff]
    %v732 = vld [vmem:[#allocation9 + $0x38] sm:$0xff]
    %v734 = vsel %vm144, %v723, 0
    %v737 = vsel %vm144, %v724, 0
    %739 = vmatpush.msra.mxu0 0.0
    %740 = vmatpush.msra.mxu0 0.0
    %741 = vmatpush.msra.mxu0 0.0
    %742 = vmatpush.msra.mxu0 0.0
    %743 = vmatpush.msra.mxu0 0.0
    %744 = vmatpush.msra.mxu0 0.0
    %745 = vmatpush.msra.mxu0 0.0
    %746 = vmatpush.msra.mxu0 0.0
    %747 = vmatpush.msra.mxu0 0.0
    %748 = vmatpush.msra.mxu0 0.0
    %749 = vmatpush.msra.mxu0 0.0
    %750 = vmatpush.msra.mxu0 0.0
    %751 = vmatpush.msra.mxu0 %v731
    %752 = vmatpush.msra.mxu0 %v729
    %753 = vmatpush.msra.mxu0 %v727
    %754 = vmatpush.msra.mxu0 %v725
    %755 = vmatmul.f32.gmra.mxu0 %v734
    %v756 = vpop.f32.mrf.mxu0
    %v757 = vadd.f32 0.0, %v756
    %758 = vmatmul.f32.gmra.mxu0 %v737
    %v759 = vpop.f32.mrf.mxu0
    %v760 = vadd.f32 0.0, %v759
    %761 = vdwg.mxu0
    %762 = vmatpush.msra.mxu0 0.0
    %763 = vmatpush.msra.mxu0 0.0
    %764 = vmatpush.msra.mxu0 0.0
    %765 = vmatpush.msra.mxu0 0.0
    %766 = vmatpush.msra.mxu0 0.0
    %767 = vmatpush.msra.mxu0 0.0
    %768 = vmatpush.msra.mxu0 0.0
    %769 = vmatpush.msra.mxu0 0.0
    %770 = vmatpush.msra.mxu0 0.0
    %771 = vmatpush.msra.mxu0 0.0
    %772 = vmatpush.msra.mxu0 0.0
    %773 = vmatpush.msra.mxu0 0.0
    %774 = vmatpush.msra.mxu0 %v732
    %775 = vmatpush.msra.mxu0 %v730
    %776 = vmatpush.msra.mxu0 %v728
    %777 = vmatpush.msra.mxu0 %v726
    %778 = vmatmul.f32.gmra.mxu0 %v734
    %v779 = vpop.f32.mrf.mxu0
    %v780 = vadd.f32 0.0, %v779
    %781 = vmatmul.f32.gmra.mxu0 %v737
    %v782 = vpop.f32.mrf.mxu0
    %v783 = vadd.f32 0.0, %v782
    %784 = vdwg.mxu0
    %vm789 = vcmask 1040384
    %v790 = vrot.slane %v757, 7
    %v791 = vrot.slane %v780, 7
    %v792 = vrot.slane %v760, 7
    %v793 = vsel %vm789, %v790, %v792
    %v794 = vrot.slane %v783, 7
    %v795 = vsel %vm789, %v791, %v794
    %v801 = vsel %vm789, 0.0, %v790
    %v802 = vsel %vm789, 0.0, %v791
    %v803 = vsel %vm789, %v792, 0.0
    %v804 = vsel %vm789, %v794, 0.0
    %v807 = vrot.slane %v801, 1
    %v808 = vrot.slane %v793, 1
    %v809 = vsel %vm253, %v807, %v808
    %v810 = vrot.slane %v803, 1
    %v811 = vsel %vm253, %v808, %v810
    %812 = vrot.lane.b32.xlu0 %v809, 64
    %v813 = vpop.permute.xlu0 %812
    %814 = vrot.lane.b32.xlu0 %v811, 64
    %v815 = vpop.permute.xlu0 %814
    %v818 = vadd.f32 %v801, %v813
    %v819 = vadd.f32 %v793, %v815
    %v822 = vrot.slane %v802, 2
    %v823 = vrot.slane %v795, 2
    %v824 = vsel %vm267, %v822, %v823
    %v825 = vrot.slane %v804, 2
    %v826 = vsel %vm267, %v823, %v825
    %v829 = vadd.f32 %v818, %v824
    %v830 = vadd.f32 %v819, %v826
    %v831 = vld [vmem:[%s12] sm:$0x1]
    %v833 = vperm.slane %v831, 0
    %v835 = vadd.f32 %v829, %v833
    %v836 = vadd.f32 %v830, %v833
    %vm837 = vcmp.ge.f32.partialorder %v835, 0.0
    %vm838 = vcmp.ge.f32.partialorder %v836, 0.0
    %v839 = vmul.f32 %v835, 0.2
    %v840 = vmul.f32 %v836, 0.2
    %v841 = vsel %vm837, %v835, %v839
    %v842 = vsel %vm838, %v836, %v840
    %v843 = vld [vmem:[%s13] sm:$0xff]
    %v844 = vld [vmem:[%s13 + $0x8] sm:$0xff]
    %v845 = vld [vmem:[%s13 + $0x10] sm:$0xff]
    %v846 = vld [vmem:[%s13 + $0x18] sm:$0xff]
    %v847 = vld [vmem:[%s13 + $0x20] sm:$0xff]
    %v848 = vld [vmem:[%s13 + $0x28] sm:$0xff]
    %v849 = vld [vmem:[%s13 + $0x30] sm:$0xff]
    %v850 = vld [vmem:[%s13 + $0x38] sm:$0xff]
    %v851 = vld [vmem:[%s13 + $0x40] sm:$0xff]
    %v852 = vld [vmem:[%s13 + $0x48] sm:$0xff]
    %v853 = vld [vmem:[%s13 + $0x50] sm:$0xff]
    %v854 = vld [vmem:[%s13 + $0x58] sm:$0xff]
    %v855 = vld [vmem:[%s13 + $0x60] sm:$0xff]
    %v856 = vld [vmem:[%s13 + $0x68] sm:$0xff]
    %v857 = vld [vmem:[%s13 + $0x70] sm:$0xff]
    %v858 = vld [vmem:[%s13 + $0x78] sm:$0xff]
    %v859 = vld [vmem:[%s13 + $0x80] sm:$0xff]
    %v860 = vld [vmem:[%s13 + $0x88] sm:$0xff]
    %v861 = vld [vmem:[%s13 + $0x90] sm:$0xff]
    %v862 = vld [vmem:[%s13 + $0x98] sm:$0xff]
    %v863 = vld [vmem:[%s13 + $0xa0] sm:$0xff]
    %v864 = vld [vmem:[%s13 + $0xa8] sm:$0xff]
    %v865 = vld [vmem:[%s13 + $0xb0] sm:$0xff]
    %v866 = vld [vmem:[%s13 + $0xb8] sm:$0xff]
    %vm867 = vcmask 523264
    %v869 = vsel %vm867, %v841, 0
    %v872 = vsel %vm867, %v842, 0
    %874 = vmatpush.msra.mxu0 0.0
    %875 = vmatpush.msra.mxu0 0.0
    %876 = vmatpush.msra.mxu0 0.0
    %877 = vmatpush.msra.mxu0 0.0
    %878 = vmatpush.msra.mxu0 0.0
    %879 = vmatpush.msra.mxu0 0.0
    %880 = vmatpush.msra.mxu0 0.0
    %881 = vmatpush.msra.mxu0 0.0
    %882 = vmatpush.msra.mxu0 %v864
    %883 = vmatpush.msra.mxu0 %v861
    %884 = vmatpush.msra.mxu0 %v858
    %885 = vmatpush.msra.mxu0 %v855
    %886 = vmatpush.msra.mxu0 %v852
    %887 = vmatpush.msra.mxu0 %v849
    %888 = vmatpush.msra.mxu0 %v846
    %889 = vmatpush.msra.mxu0 %v843
    %890 = vmatmul.f32.gmra.mxu0 %v869
    %v891 = vpop.f32.mrf.mxu0
    %v892 = vadd.f32 0.0, %v891
    %893 = vmatmul.f32.gmra.mxu0 %v872
    %v894 = vpop.f32.mrf.mxu0
    %v895 = vadd.f32 0.0, %v894
    %896 = vdwg.mxu0
    %897 = vmatpush.msra.mxu0 0.0
    %898 = vmatpush.msra.mxu0 0.0
    %899 = vmatpush.msra.mxu0 0.0
    %900 = vmatpush.msra.mxu0 0.0
    %901 = vmatpush.msra.mxu0 0.0
    %902 = vmatpush.msra.mxu0 0.0
    %903 = vmatpush.msra.mxu0 0.0
    %904 = vmatpush.msra.mxu0 0.0
    %905 = vmatpush.msra.mxu0 %v865
    %906 = vmatpush.msra.mxu0 %v862
    %907 = vmatpush.msra.mxu0 %v859
    %908 = vmatpush.msra.mxu0 %v856
    %909 = vmatpush.msra.mxu0 %v853
    %910 = vmatpush.msra.mxu0 %v850
    %911 = vmatpush.msra.mxu0 %v847
    %912 = vmatpush.msra.mxu0 %v844
    %913 = vmatmul.f32.gmra.mxu0 %v869
    %v914 = vpop.f32.mrf.mxu0
    %v915 = vadd.f32 0.0, %v914
    %916 = vmatmul.f32.gmra.mxu0 %v872
    %v917 = vpop.f32.mrf.mxu0
    %v918 = vadd.f32 0.0, %v917
    %919 = vdwg.mxu0
    %920 = vmatpush.msra.mxu0 0.0
    %921 = vmatpush.msra.mxu0 0.0
    %922 = vmatpush.msra.mxu0 0.0
    %923 = vmatpush.msra.mxu0 0.0
    %924 = vmatpush.msra.mxu0 0.0
    %925 = vmatpush.msra.mxu0 0.0
    %926 = vmatpush.msra.mxu0 0.0
    %927 = vmatpush.msra.mxu0 0.0
    %928 = vmatpush.msra.mxu0 %v866
    %929 = vmatpush.msra.mxu0 %v863
    %930 = vmatpush.msra.mxu0 %v860
    %931 = vmatpush.msra.mxu0 %v857
    %932 = vmatpush.msra.mxu0 %v854
    %933 = vmatpush.msra.mxu0 %v851
    %934 = vmatpush.msra.mxu0 %v848
    %935 = vmatpush.msra.mxu0 %v845
    %936 = vmatmul.f32.gmra.mxu0 %v869
    %v937 = vpop.f32.mrf.mxu0
    %v938 = vadd.f32 0.0, %v937
    %939 = vmatmul.f32.gmra.mxu0 %v872
    %v940 = vpop.f32.mrf.mxu0
    %v941 = vadd.f32 0.0, %v940
    %942 = vdwg.mxu0
    %v949 = vrot.slane %v892, 7
    %v950 = vrot.slane %v915, 7
    %v951 = vrot.slane %v938, 7
    %v952 = vrot.slane %v895, 7
    %v953 = vsel %vm789, %v949, %v952
    %v954 = vrot.slane %v918, 7
    %v955 = vsel %vm789, %v950, %v954
    %v956 = vrot.slane %v941, 7
    %v957 = vsel %vm789, %v951, %v956
    %v964 = vsel %vm789, 0.0, %v949
    %v965 = vsel %vm789, 0.0, %v950
    %v966 = vsel %vm789, 0.0, %v951
    %v967 = vsel %vm789, %v954, 0.0
    %v968 = vsel %vm789, %v956, 0.0
    %v971 = vrot.slane %v965, 1
    %v972 = vrot.slane %v955, 1
    %v973 = vsel %vm253, %v971, %v972
    %v974 = vrot.slane %v967, 1
    %v975 = vsel %vm253, %v972, %v974
    %v978 = vadd.f32 %v964, %v973
    %v979 = vadd.f32 %v953, %v975
    %v982 = vrot.slane %v966, 2
    %v983 = vrot.slane %v957, 2
    %v984 = vsel %vm267, %v982, %v983
    %v985 = vrot.slane %v968, 2
    %v986 = vsel %vm267, %v983, %v985
    %v989 = vadd.f32 %v978, %v984
    %v990 = vadd.f32 %v979, %v986
    %v991 = vld [vmem:[%s14] sm:$0x1]
    %v993 = vperm.slane %v991, 0
    %v995 = vadd.f32 %v989, %v993
    %v996 = vadd.f32 %v990, %v993
    %vm997 = vcmp.ge.f32.partialorder %v995, 0.0
    %vm998 = vcmp.ge.f32.partialorder %v996, 0.0
    %v999 = vmul.f32 %v995, 0.2
    %v1000 = vmul.f32 %v996, 0.2
    %v1001 = vsel %vm997, %v995, %v999
    %v1002 = vsel %vm998, %v996, %v1000
    %v1003 = vld [vmem:[%s15] sm:$0xff]
    %v1004 = vld [vmem:[%s15 + $0x8] sm:$0xff]
    %v1005 = vld [vmem:[%s15 + $0x10] sm:$0xff]
    %v1006 = vld [vmem:[%s15 + $0x18] sm:$0xff]
    %v1007 = vld [vmem:[%s15 + $0x20] sm:$0xff]
    %v1008 = vld [vmem:[%s15 + $0x28] sm:$0xff]
    %v1009 = vld [vmem:[%s15 + $0x30] sm:$0xff]
    %v1010 = vld [vmem:[%s15 + $0x38] sm:$0xff]
    %v1011 = vld [vmem:[%s15 + $0x40] sm:$0xff]
    %v1012 = vld [vmem:[%s15 + $0x48] sm:$0xff]
    %v1013 = vld [vmem:[%s15 + $0x50] sm:$0xff]
    %v1014 = vld [vmem:[%s15 + $0x58] sm:$0xff]
    %v1015 = vld [vmem:[%s15 + $0x60] sm:$0xff]
    %v1016 = vld [vmem:[%s15 + $0x68] sm:$0xff]
    %v1017 = vld [vmem:[%s15 + $0x70] sm:$0xff]
    %v1018 = vld [vmem:[%s15 + $0x78] sm:$0xff]
    %1019 = vmatpush.msra.mxu0 %v1018
    %1020 = vmatpush.msra.mxu0 %v1017
    %1021 = vmatpush.msra.mxu0 %v1016
    %1022 = vmatpush.msra.mxu0 %v1015
    %1023 = vmatpush.msra.mxu0 %v1014
    %1024 = vmatpush.msra.mxu0 %v1013
    %1025 = vmatpush.msra.mxu0 %v1012
    %1026 = vmatpush.msra.mxu0 %v1011
    %1027 = vmatpush.msra.mxu0 %v1010
    %1028 = vmatpush.msra.mxu0 %v1009
    %1029 = vmatpush.msra.mxu0 %v1008
    %1030 = vmatpush.msra.mxu0 %v1007
    %1031 = vmatpush.msra.mxu0 %v1006
    %1032 = vmatpush.msra.mxu0 %v1005
    %1033 = vmatpush.msra.mxu0 %v1004
    %1034 = vmatpush.msra.mxu0 %v1003
    %1035 = vmatmul.f32.gmra.mxu0 %v1001
    %v1036 = vpop.f32.mrf.mxu0
    %v1037 = vadd.f32 0.0, %v1036
    %1038 = vmatmul.f32.gmra.mxu0 %v1002
    %v1039 = vpop.f32.mrf.mxu0
    %v1040 = vadd.f32 0.0, %v1039
    %1041 = vdwg.mxu0
    %v1044 = vrot.slane %v1037, 7
    %v1045 = vrot.slane %v1040, 7
    %v1046 = vsel %vm789, %v1044, %v1045
    %v1050 = vsel %vm789, 0.0, %v1044
    %v1051 = vsel %vm789, %v1045, 0.0
    %v1054 = vrot.slane %v1050, 1
    %v1055 = vrot.slane %v1046, 1
    %v1056 = vsel %vm253, %v1054, %v1055
    %v1057 = vrot.slane %v1051, 1
    %v1058 = vsel %vm253, %v1055, %v1057
    %1059 = vrot.lane.b32.xlu0 %v1056, 112
    %v1060 = vpop.permute.xlu0 %1059
    %1061 = vrot.lane.b32.xlu0 %v1058, 112
    %v1062 = vpop.permute.xlu0 %1061
    %v1065 = vadd.f32 %v1050, %v1060
    %v1066 = vadd.f32 %v1046, %v1062
    %v1067 = vrot.slane %v1050, 2
    %v1068 = vrot.slane %v1046, 2
    %v1069 = vsel %vm267, %v1067, %v1068
    %v1070 = vrot.slane %v1051, 2
    %v1071 = vsel %vm267, %v1068, %v1070
    %1072 = vrot.lane.b32.xlu0 %v1069, 96
    %v1073 = vpop.permute.xlu0 %1072
    %1074 = vrot.lane.b32.xlu0 %v1071, 96
    %v1075 = vpop.permute.xlu0 %1074
    %v1078 = vadd.f32 %v1065, %v1073
    %v1079 = vadd.f32 %v1066, %v1075
    %v1080 = vld [vmem:[%s16] sm:$0x1]
    %v1082 = vperm.slane %v1080, 0
    %v1084 = vadd.f32 %v1078, %v1082
    %v1085 = vadd.f32 %v1079, %v1082
    %v1086 = vtanh.pop %v1084
    %v1087 = vtanh.pop %v1085
    %1088 = vst.msk [vmem:[%s17] sm:$0xff] %vm178, %v1086
    %1089 = vst.msk [vmem:[%s17 + $0x8] sm:$0xff] %vm178, %v1087
    // Predicated region
    $region90: #{decoder_forward.1} parent=1 // pred_check
      _
    $region91: #{decoder_forward.1} parent=1 // pred_check_branch
      %1091 = sbr.rel (0) target = $region93
    $region92: #{decoder_forward.1} parent=1 // pred_region
      _
    $region93: #{decoder_forward.1} parent=1 // pred_fallthru
      _
    // Predicated region
    $region94: #{decoder_forward.1} parent=1 // pred_check
      _
    $region95: #{decoder_forward.1} parent=1 // pred_check_branch
      %1093 = sbr.rel (0) target = $region97
    $region96: #{decoder_forward.1} parent=1 // pred_region
      _
    $region97: #{decoder_forward.1} parent=1 // pred_fallthru
      _
    %1094 = vsyncpa [#allocation3], 1
    %1095 = vsyncpa [#allocation5], 1
    %1096 = vsyncpa [#allocation8], 1

</llo_original>
